<compile_context>
chip_gen: v5e
topology: v5e:2x2
jax: 0.10.0
libtpu: 0.0.40
codegen_flags: <defaults>
</compile_context>

<pallas_src>
import functools
import random

import jax
import jax.numpy as jnp
from jax.experimental import pallas as pl
from jax.experimental.pallas import tpu as pltpu

LANE = 128


def _round_up(n, m):
    return ((n + m - 1) // m) * m


def weirdnet_kernel(*refs, in_dim, n_inner, clamp_before_out):
    """refs = (x, w1[, w2], w3, out); w2 is only passed when n_inner > 0."""
    if n_inner > 0:
        x_ref, w1_ref, w2_ref, w3_ref, o_ref = refs
    else:
        x_ref, w1_ref, w3_ref, o_ref = refs
        w2_ref = None

    mx = w1_ref.dtype                   # bf16 by default (f32 optional)
    x = x_ref[...].astype(mx)           # in-kernel cast: x streams from HBM once

    # Layer 1: h = relu(x @ W1 + b1). The bias row-add is one cheap VPU op and
    # also injects the constant-1 lane at index `hidden_dim` of h, which
    # realizes the folded biases of all downstream layers.
    h = jnp.dot(x, w1_ref[:in_dim, :], preferred_element_type=jnp.float32)
    b1 = w1_ref[in_dim:in_dim + 1, :].astype(jnp.float32)       # (1, hid_p)
    h = jnp.maximum(h + b1, 0.0)                                # h >= 0

    # Weight-shared middle layers executed in-kernel (the last one, if any,
    # was folded into W3 at build time). Unrolled at trace time.
    if n_inner > 0:
        w2 = w2_ref[...]                # loop-invariant: loaded once
        for i in range(n_inner):
            if i > 0:                   # first clamp is a no-op (h >= 0)
                h = jnp.maximum(h, 0.0)
            h = jnp.dot(h.astype(mx), w2, preferred_element_type=jnp.float32)

    if clamp_before_out:                # clamp of the folded last middle layer
        h = jnp.maximum(h, 0.0)

    # Output layer (bias folded via the ones lane). Lane-dense 128-wide store.
    o_ref[...] = jnp.dot(h.astype(mx), w3_ref[...],
                         preferred_element_type=jnp.float32).astype(o_ref.dtype)


def weirdnet_forward(x, fused, *, batch_tile=1024):
    """x: (B, input_dim) f32. fused: dict from build_fused_params.

    batch_tile=1024 keeps the double-buffered f32 x tile plus resident weights
    and output tiles under v5e's 16 MiB default scoped-VMEM budget; on
    v6e/v7x (32 MiB scoped) it can be raised to ~2048 without touching
    vmem_limit_bytes.
    """
    w1, w2, w3 = fused["w1"], fused["w2"], fused["w3"]
    in_dim = fused["input_dim"]
    out_dim = fused["output_dim"]
    n_middle = fused["n_middle"]
    n_inner = max(n_middle - 1, 0)      # middles run in-kernel (last one folded)

    in_rows, hid_p = w1.shape
    out_p = w3.shape[1]
    B = x.shape[0]

    # Adaptive batch tiling: one tile if it fits (B=64 -> grid (1,), no pad,
    # no input copy); otherwise an even number of equal tiles so both v7x
    # TensorCores run at large batch, padding the batch minimally.
    if B <= batch_tile:
        tiles, tb, Bp = 1, B, B         # block dims == full dims: always legal
    else:
        tiles = pl.cdiv(B, batch_tile)
        if tiles % 2 == 1:
            tiles += 1                  # even tile count for v7x megacore
        tb = _round_up(pl.cdiv(B, tiles), 8)
        Bp = tiles * tb
        if Bp != B:
            x = jnp.pad(x, ((0, Bp - B), (0, 0)))   # at most a few 8-row groups

    kernel = functools.partial(
        weirdnet_kernel, in_dim=in_dim, n_inner=n_inner,
        clamp_before_out=(n_middle >= 2))

    # Constant weight index_maps -> blocks fetched once, resident across tiles.
    in_specs = [pl.BlockSpec((tb, in_dim), lambda i: (i, 0)),
                pl.BlockSpec((in_rows, hid_p), lambda i: (0, 0))]
    args = [x, w1]
    if n_inner > 0:
        in_specs.append(pl.BlockSpec((hid_p, hid_p), lambda i: (0, 0)))
        args.append(w2)
    in_specs.append(pl.BlockSpec((hid_p, out_p), lambda i: (0, 0)))
    args.append(w3)

    nbytes = lambda a: a.size * a.dtype.itemsize
    flops = 2 * Bp * (in_dim * hid_p + n_inner * hid_p * hid_p + hid_p * out_p)
    bytes_accessed = (nbytes(x) + sum(nbytes(a) for a in args[1:])
                      + Bp * out_p * 4)
    cost = pl.CostEstimate(flops=flops, transcendentals=0,
                           bytes_accessed=bytes_accessed)

    y_pad = pl.pallas_call(
        kernel,
        out_shape=jax.ShapeDtypeStruct((Bp, out_p), jnp.float32),
        grid=(tiles,),
        in_specs=in_specs,
        out_specs=pl.BlockSpec((tb, out_p), lambda i: (i, 0)),
        compiler_params=pltpu.CompilerParams(
            dimension_semantics=("parallel",),  # batch tiles split over TCs
        ),
        cost_estimate=cost,
    )(*args)

    return y_pad[:B, :out_dim]


def init_linear_params(key, in_dim, out_dim):
    """PyTorch-style Linear init: U(-1/sqrt(in), 1/sqrt(in)). Returns W^T, b."""
    kw, kb = jax.random.split(key)
    bound = 1.0 / (in_dim ** 0.5)
    w = jax.random.uniform(kw, (out_dim, in_dim), jnp.float32, -bound, bound)
    b = jax.random.uniform(kb, (out_dim,), jnp.float32, -bound, bound)
    return w.T, b


def build_fused_params(w1t, b1, w2t, b2, w3t, b3, n_middle, dtype=jnp.bfloat16):
    """Fold biases into the weights and lane-pad hidden/output dims to 128.

    * W1 gets an extra bias row at index `input_dim`; that row also writes a
      constant 1 into lane `hidden_dim` of h, so every later layer picks its
      bias up from that lane (its own bias row at index `hidden_dim`).
    * When n_middle >= 1, the last weight-shared layer is folded into the
      output layer (W3' = W2 @ W3, b3' = b2 @ W3 + b3) -- valid because the
      reference applies no ReLU between the last middle matmul and the output
      matmul. n_middle is resolved at trace time, so this is a pure
      parameter-build transformation.
    * dtype=jnp.bfloat16 (default) is the fast MXU path on v5e/v6e/v7x; the
      kernel accumulates in f32. Pass jnp.float32 for bit-tighter outputs.
    """
    in_dim, hid = w1t.shape
    out_dim = w3t.shape[1]
    in_rows = _round_up(in_dim + 1, 8)      # weight rows + bias row, 8-aligned
    hid_p = _round_up(hid + 1, LANE)
    out_p = _round_up(out_dim, LANE)

    w1 = jnp.zeros((in_rows, hid_p), jnp.float32)
    w1 = w1.at[:in_dim, :hid].set(w1t)
    w1 = w1.at[in_dim, :hid].set(b1)
    w1 = w1.at[in_dim, hid].set(1.0)        # inject the "ones" lane into h

    w2 = jnp.zeros((hid_p, hid_p), jnp.float32)
    w2 = w2.at[:hid, :hid].set(w2t)
    w2 = w2.at[hid, :hid].set(b2)
    w2 = w2.at[hid, hid].set(1.0)           # keep the "ones" lane alive

    if n_middle >= 1:                        # fold last shared layer into output
        w3_eff = w2t @ w3t
        b3_eff = b2 @ w3t + b3
    else:
        w3_eff, b3_eff = w3t, b3
    w3 = jnp.zeros((hid_p, out_p), jnp.float32)
    w3 = w3.at[:hid, :out_dim].set(w3_eff)
    w3 = w3.at[hid, :out_dim].set(b3_eff)

    return {"w1": w1.astype(dtype), "w2": w2.astype(dtype),
            "w3": w3.astype(dtype), "input_dim": in_dim,
            "output_dim": out_dim, "n_middle": n_middle}


def reference_forward(x, w1t, b1, w2t, b2, w3t, b3, n_middle):
    hp = jax.lax.Precision.HIGHEST
    h = jnp.maximum(jnp.dot(x, w1t, precision=hp) + b1, 0.0)
    for _ in range(n_middle):
        h = jnp.dot(jnp.maximum(h, 0.0), w2t, precision=hp) + b2
    return jnp.dot(h, w3t, precision=hp) + b3


if __name__ == "__main__":
    # Shapes from the original module spec.
    batch_size = 64
    input_dim = 1000
    hidden_dim = 100
    output_dim = 10

    key = jax.random.PRNGKey(0)
    kx, k1, k2, k3 = jax.random.split(key, 4)

    x = jax.random.normal(kx, (batch_size, input_dim), jnp.float32)
    w1t, b1 = init_linear_params(k1, input_dim, hidden_dim)
    w2t, b2 = init_linear_params(k2, hidden_dim, hidden_dim)
    w3t, b3 = init_linear_params(k3, hidden_dim, output_dim)

    # Deterministic stand-in for torch's random.randint(0, 3) depth choice
    # (Python-level control flow, resolved at trace time).
    random.seed(0)
    n_middle = random.randint(0, 3)

    # bf16 fused operands (f32 accumulation) = the recommended fast path.
    fused = build_fused_params(w1t, b1, w2t, b2, w3t, b3, n_middle,
                               dtype=jnp.bfloat16)

    y = weirdnet_forward(x, fused)
    y = jax.block_until_ready(y)

    y_ref = reference_forward(x, w1t, b1, w2t, b2, w3t, b3, n_middle)
    assert y.shape == (batch_size, output_dim)
    # bf16 operands vs. the f32 reference: expected max abs error here is a few
    # 1e-3 (bf16 rounding of x / fused weights, f32 accumulation); 5e-2 gives a
    # >10x margin while still catching real bugs.
    assert jnp.allclose(y, y_ref, atol=5e-2, rtol=5e-2), (
        float(jnp.max(jnp.abs(y - y_ref))))

    print("KERNEL_OK")
</pallas_src>

<mosaic_0001>
module attributes {stable_mosaic.version = 11 : i64} {
  func.func @weirdnet_kernel(%arg0: i32, %arg1: memref<64x1000xf32, #tpu.memory_space<vmem>>, %arg2: memref<1008x128xbf16, #tpu.memory_space<vmem>>, %arg3: memref<128x128xbf16, #tpu.memory_space<vmem>>, %arg4: memref<128x128xbf16, #tpu.memory_space<vmem>>, %arg5: memref<64x128xf32, #tpu.memory_space<vmem>>) attributes {dimension_semantics = [#tpu.dimension_semantics<parallel>], iteration_bounds = array<i64: 1>, scalar_prefetch = 0 : i64, scratch_operands = 0 : i64, tpu.core_type = #tpu.core_type<tc>, window_params = [{transform_indices = @transform_0, window_bounds = array<i64: 64, 1000>}, {pipeline_mode = #tpu.pipeline_mode<synchronous>, transform_indices = @transform_1, window_bounds = array<i64: 1008, 128>}, {pipeline_mode = #tpu.pipeline_mode<synchronous>, transform_indices = @transform_2, window_bounds = array<i64: 128, 128>}, {pipeline_mode = #tpu.pipeline_mode<synchronous>, transform_indices = @transform_3, window_bounds = array<i64: 128, 128>}, {transform_indices = @transform_4, window_bounds = array<i64: 64, 128>}]} {
    %c0 = arith.constant 0 : index
    %c0_0 = arith.constant 0 : index
    %0 = vector.load %arg1[%c0, %c0_0] : memref<64x1000xf32, #tpu.memory_space<vmem>>, vector<64x1000xf32>
    %1 = arith.truncf %0 : vector<64x1000xf32> to vector<64x1000xbf16>
    %c0_1 = arith.constant 0 : index
    %c0_2 = arith.constant 0 : index
    %2 = vector.load %arg2[%c0_1, %c0_2] : memref<1008x128xbf16, #tpu.memory_space<vmem>>, vector<1000x128xbf16>
    %cst = arith.constant dense<0.000000e+00> : vector<64x128xf32>
    %3 = tpu.matmul %1, %2, %cst {dimension_numbers = #tpu.dot_dimension_numbers<[1], [0], [0], [1], [0, 0, 1, 1], [], []>} : vector<64x1000xbf16>, vector<1000x128xbf16>, vector<64x128xf32> -> vector<64x128xf32>
    %c1000 = arith.constant 1000 : index
    %c0_3 = arith.constant 0 : index
    %4 = vector.load %arg2[%c1000, %c0_3] : memref<1008x128xbf16, #tpu.memory_space<vmem>>, vector<1x128xbf16>
    %5 = arith.extf %4 : vector<1x128xbf16> to vector<1x128xf32>
    %6 = vector.broadcast %5 : vector<1x128xf32> to vector<64x128xf32>
    %7 = arith.addf %3, %6 : vector<64x128xf32>
    %cst_4 = arith.constant 0.000000e+00 : f32
    %8 = vector.broadcast %cst_4 : f32 to vector<64x128xf32>
    %9 = arith.maximumf %7, %8 : vector<64x128xf32>
    %c0_5 = arith.constant 0 : index
    %c0_6 = arith.constant 0 : index
    %10 = vector.load %arg3[%c0_5, %c0_6] : memref<128x128xbf16, #tpu.memory_space<vmem>>, vector<128x128xbf16>
    %11 = arith.truncf %9 : vector<64x128xf32> to vector<64x128xbf16>
    %cst_7 = arith.constant dense<0.000000e+00> : vector<64x128xf32>
    %12 = tpu.matmul %11, %10, %cst_7 {dimension_numbers = #tpu.dot_dimension_numbers<[1], [0], [0], [1], [0, 0, 1, 1], [], []>} : vector<64x128xbf16>, vector<128x128xbf16>, vector<64x128xf32> -> vector<64x128xf32>
    %cst_8 = arith.constant 0.000000e+00 : f32
    %13 = vector.broadcast %cst_8 : f32 to vector<64x128xf32>
    %14 = arith.maximumf %12, %13 : vector<64x128xf32>
    %15 = arith.truncf %14 : vector<64x128xf32> to vector<64x128xbf16>
    %cst_9 = arith.constant dense<0.000000e+00> : vector<64x128xf32>
    %16 = tpu.matmul %15, %10, %cst_9 {dimension_numbers = #tpu.dot_dimension_numbers<[1], [0], [0], [1], [0, 0, 1, 1], [], []>} : vector<64x128xbf16>, vector<128x128xbf16>, vector<64x128xf32> -> vector<64x128xf32>
    %cst_10 = arith.constant 0.000000e+00 : f32
    %17 = vector.broadcast %cst_10 : f32 to vector<64x128xf32>
    %18 = arith.maximumf %16, %17 : vector<64x128xf32>
    %19 = arith.truncf %18 : vector<64x128xf32> to vector<64x128xbf16>
    %c0_11 = arith.constant 0 : index
    %c0_12 = arith.constant 0 : index
    %20 = vector.load %arg4[%c0_11, %c0_12] : memref<128x128xbf16, #tpu.memory_space<vmem>>, vector<128x128xbf16>
    %cst_13 = arith.constant dense<0.000000e+00> : vector<64x128xf32>
    %21 = tpu.matmul %19, %20, %cst_13 {dimension_numbers = #tpu.dot_dimension_numbers<[1], [0], [0], [1], [0, 0, 1, 1], [], []>} : vector<64x128xbf16>, vector<128x128xbf16>, vector<64x128xf32> -> vector<64x128xf32>
    %c0_14 = arith.constant 0 : index
    %c0_15 = arith.constant 0 : index
    %22 = vector.load %arg5[%c0_14, %c0_15] : memref<64x128xf32, #tpu.memory_space<vmem>>, vector<64x128xf32>
    tpu.vector_store %arg5[%c0_14, %c0_15], %21 {strides = array<i32>} : memref<64x128xf32, #tpu.memory_space<vmem>>, vector<64x128xf32>,
    return
  }
  func.func @transform_0(%arg0: i32) -> (i32, i32) {
    %c0_i32 = arith.constant 0 : i32
    %c0_i32_0 = arith.constant 0 : i32
    return %arg0, %c0_i32 : i32, i32
  }
  func.func @transform_1(%arg0: i32) -> (i32, i32) {
    %c0_i32 = arith.constant 0 : i32
    %c0_i32_0 = arith.constant 0 : i32
    %c0_i32_1 = arith.constant 0 : i32
    return %c0_i32, %c0_i32_0 : i32, i32
  }
  func.func @transform_2(%arg0: i32) -> (i32, i32) {
    %c0_i32 = arith.constant 0 : i32
    %c0_i32_0 = arith.constant 0 : i32
    %c0_i32_1 = arith.constant 0 : i32
    return %c0_i32, %c0_i32_0 : i32, i32
  }
  func.func @transform_3(%arg0: i32) -> (i32, i32) {
    %c0_i32 = arith.constant 0 : i32
    %c0_i32_0 = arith.constant 0 : i32
    %c0_i32_1 = arith.constant 0 : i32
    return %c0_i32, %c0_i32_0 : i32, i32
  }
  func.func @transform_4(%arg0: i32) -> (i32, i32) {
    %c0_i32 = arith.constant 0 : i32
    %c0_i32_0 = arith.constant 0 : i32
    return %arg0, %c0_i32 : i32, i32
  }
}

</mosaic_0001>

<llo_original>
// kernel: tpu_custom_call.1
$region0: #{tpu_custom_call.1}
  #allocation0 [shape = 'u32[]', space=smem, size = 0x4, offset = 0x4, fixed_abs, tag = 'smem constant byte address 0x4 - core index']
  #allocation1 [shape = 'u32[72,128]{1,0:T(1,128)}', space=vmem, size = 0x9000, scoped, tag = 'internal scratch']
  %s0 = inlined_call_operand.hbm [shape: f32[64,1000], index: 0, kind: input, shape index: {}]
  %s1 = inlined_call_operand.hbm [shape: bf16[1008,128], index: 1, kind: input, shape index: {}]
  %s2 = inlined_call_operand.hbm [shape: bf16[128,128], index: 2, kind: input, shape index: {}]
  %s3 = inlined_call_operand.hbm [shape: bf16[128,128], index: 3, kind: input, shape index: {}]
  %s4 = inlined_call_operand.hbm [shape: f32[64,128], index: 4, kind: output, shape index: {}]
  %s5 = sld [smem:[#allocation0]]
  $region42: #{tpu_custom_call.1} parent=0
    _
  %s7 = ssub.s32 1, %s5
  %s8 = scalar_select 0, %s7, %s5
  $region1: #{tpu_custom_call.1} parent=0
    #allocation2 [shape = 'u8[262144]{0}', space=vmem, size = 0x40000, scoped, tag = 'input window, operand 0, single buffered']
    #allocation3 [shape = 's32[1]{0}', space=sflag, size = 0x4, scoped, tag = 'scoped memory for tpu_custom_call.1']
    #allocation4 [shape = 's32[1]{0}', space=sflag, size = 0x4, scoped, tag = 'scoped memory for tpu_custom_call.1']
    #allocation5 [shape = 'u8[258048]{0}', space=vmem, size = 0x3f000, scoped, tag = 'input window, operand 1, single buffered']
    #allocation6 [shape = 's32[1]{0}', space=sflag, size = 0x4, scoped, tag = 'scoped memory for tpu_custom_call.1']
    #allocation7 [shape = 'u8[32768]{0}', space=vmem, size = 0x8000, scoped, tag = 'input window, operand 2, single buffered']
    #allocation8 [shape = 'u8[32768]{0}', space=vmem, size = 0x8000, scoped, tag = 'input window, operand 3, single buffered']
    #allocation9 [shape = 's32[1]{0}', space=sflag, size = 0x4, scoped, tag = 'scoped memory for tpu_custom_call.1']
    #allocation10 [shape = 'u8[32768]{0}', space=vmem, size = 0x8000, scoped, tag = 'output window, operand 0, single buffered']
    %9 = vsyncpa [#allocation3], 0
    %10 = vsyncpa [#allocation6], 0
    %11 = vsyncpa [#allocation9], 0
    %12 = vsyncpa [#allocation4], 0
    // Predicated region
    $region2: #{tpu_custom_call.1} parent=1 // pred_check
      _
    $region3: #{tpu_custom_call.1} parent=1 // pred_check_branch
      %14 = sbr.rel (0) target = $region5
    $region4: #{tpu_custom_call.1} parent=1 // pred_region
      %16 = vsyncadd [#allocation3], 0
      %s17 = sshll.u32 %s0, 4
      %s18 = int_to_ptr.hbm [resolvable:$true] %s17
      %s19 = sshll.u32 [#allocation2], 4
      %s20 = int_to_ptr.vmem [resolvable:$true] %s19
      %25 = dma.hbm_to_vmem [thread:$0]  %s18, 8192, %s20, [#allocation3], 1024, 1024, 64
    $region5: #{tpu_custom_call.1} parent=1 // pred_fallthru
      _
    // Predicated region
    $region6: #{tpu_custom_call.1} parent=1 // pred_check
      _
    $region7: #{tpu_custom_call.1} parent=1 // pred_check_branch
      %27 = sbr.rel (0) target = $region9
    $region8: #{tpu_custom_call.1} parent=1 // pred_region
      %29 = vsyncadd [#allocation6], 0
      %s30 = sshll.u32 %s1, 4
      %s31 = int_to_ptr.hbm [resolvable:$true] %s30
      %s32 = sshll.u32 [#allocation5], 4
      %s33 = int_to_ptr.vmem [resolvable:$true] %s32
      %38 = dma.hbm_to_vmem [thread:$0]  %s31, 8064, %s33, [#allocation6], 64, 64, 4
    $region9: #{tpu_custom_call.1} parent=1 // pred_fallthru
      _
    // Predicated region
    $region10: #{tpu_custom_call.1} parent=1 // pred_check
      _
    $region11: #{tpu_custom_call.1} parent=1 // pred_check_branch
      %40 = sbr.rel (0) target = $region13
    $region12: #{tpu_custom_call.1} parent=1 // pred_region
      %42 = vsyncadd [#allocation6], 0
      %s43 = sshll.u32 %s2, 4
      %s44 = int_to_ptr.hbm [resolvable:$true] %s43
      %s45 = sshll.u32 [#allocation7], 4
      %s46 = int_to_ptr.vmem [resolvable:$true] %s45
      %51 = dma.hbm_to_vmem [thread:$0]  %s44, 1024, %s46, [#allocation6], 64, 64, 4
    $region13: #{tpu_custom_call.1} parent=1 // pred_fallthru
      _
    // Predicated region
    $region14: #{tpu_custom_call.1} parent=1 // pred_check
      _
    $region15: #{tpu_custom_call.1} parent=1 // pred_check_branch
      %53 = sbr.rel (0) target = $region17
    $region16: #{tpu_custom_call.1} parent=1 // pred_region
      %55 = vsyncadd [#allocation9], 0
      %s56 = sshll.u32 %s3, 4
      %s57 = int_to_ptr.hbm [resolvable:$true] %s56
      %s58 = sshll.u32 [#allocation8], 4
      %s59 = int_to_ptr.vmem [resolvable:$true] %s58
      %64 = dma.hbm_to_vmem [thread:$0]  %s57, 1024, %s59, [#allocation9], 64, 64, 4
    $region17: #{tpu_custom_call.1} parent=1 // pred_fallthru
      _
    // Predicated region
    $region18: #{tpu_custom_call.1} parent=1 // pred_check
      _
    $region19: #{tpu_custom_call.1} parent=1 // pred_check_branch
      %66 = sbr.rel (0) target = $region21
    $region20: #{tpu_custom_call.1} parent=1 // pred_region
      %68 = dma.done [#allocation3], 8192
    $region21: #{tpu_custom_call.1} parent=1 // pred_fallthru
      _
    // Predicated region
    $region22: #{tpu_custom_call.1} parent=1 // pred_check
      _
    $region23: #{tpu_custom_call.1} parent=1 // pred_check_branch
      %70 = sbr.rel (0) target = $region25
    $region24: #{tpu_custom_call.1} parent=1 // pred_region
      %72 = dma.done [#allocation6], 8064
    $region25: #{tpu_custom_call.1} parent=1 // pred_fallthru
      _
    // Predicated region
    $region26: #{tpu_custom_call.1} parent=1 // pred_check
      _
    $region27: #{tpu_custom_call.1} parent=1 // pred_check_branch
      %74 = sbr.rel (0) target = $region29
    $region28: #{tpu_custom_call.1} parent=1 // pred_region
      %76 = dma.done [#allocation6], 1024
    $region29: #{tpu_custom_call.1} parent=1 // pred_fallthru
      _
    // Predicated region
    $region30: #{tpu_custom_call.1} parent=1 // pred_check
      _
    $region31: #{tpu_custom_call.1} parent=1 // pred_check_branch
      %78 = sbr.rel (0) target = $region33
    $region32: #{tpu_custom_call.1} parent=1 // pred_region
      %80 = dma.done [#allocation9], 1024
    $region33: #{tpu_custom_call.1} parent=1 // pred_fallthru
      _
    %v82 = vld [vmem:[#allocation2] sm:$0xff]
    %v83 = vld [vmem:[#allocation2 + $0x8] sm:$0xff]
    %v84 = vld [vmem:[#allocation2 + $0x10] sm:$0xff]
    %v85 = vld [vmem:[#allocation2 + $0x18] sm:$0xff]
    %v86 = vld [vmem:[#allocation2 + $0x20] sm:$0xff]
    %v87 = vld [vmem:[#allocation2 + $0x28] sm:$0xff]
    %v88 = vld [vmem:[#allocation2 + $0x30] sm:$0xff]
    %v89 = vld [vmem:[#allocation2 + $0x38] sm:$0xff]
    %v90 = vld [vmem:[#allocation2 + $0x40] sm:$0xff]
    %v91 = vld [vmem:[#allocation2 + $0x48] sm:$0xff]
    %v92 = vld [vmem:[#allocation2 + $0x50] sm:$0xff]
    %v93 = vld [vmem:[#allocation2 + $0x58] sm:$0xff]
    %v94 = vld [vmem:[#allocation2 + $0x60] sm:$0xff]
    %v95 = vld [vmem:[#allocation2 + $0x68] sm:$0xff]
    %v96 = vld [vmem:[#allocation2 + $0x70] sm:$0xff]
    %v97 = vld [vmem:[#allocation2 + $0x78] sm:$0xff]
    %v98 = vld [vmem:[#allocation2 + $0x80] sm:$0xff]
    %v99 = vld [vmem:[#allocation2 + $0x88] sm:$0xff]
    %v100 = vld [vmem:[#allocation2 + $0x90] sm:$0xff]
    %v101 = vld [vmem:[#allocation2 + $0x98] sm:$0xff]
    %v102 = vld [vmem:[#allocation2 + $0xa0] sm:$0xff]
    %v103 = vld [vmem:[#allocation2 + $0xa8] sm:$0xff]
    %v104 = vld [vmem:[#allocation2 + $0xb0] sm:$0xff]
    %v105 = vld [vmem:[#allocation2 + $0xb8] sm:$0xff]
    %v106 = vld [vmem:[#allocation2 + $0xc0] sm:$0xff]
    %v107 = vld [vmem:[#allocation2 + $0xc8] sm:$0xff]
    %v108 = vld [vmem:[#allocation2 + $0xd0] sm:$0xff]
    %v109 = vld [vmem:[#allocation2 + $0xd8] sm:$0xff]
    %v110 = vld [vmem:[#allocation2 + $0xe0] sm:$0xff]
    %v111 = vld [vmem:[#allocation2 + $0xe8] sm:$0xff]
    %v112 = vld [vmem:[#allocation2 + $0xf0] sm:$0xff]
    %v113 = vld [vmem:[#allocation2 + $0xf8] sm:$0xff]
    %v114 = vld [vmem:[#allocation2 + $0x100] sm:$0xff]
    %v115 = vld [vmem:[#allocation2 + $0x108] sm:$0xff]
    %v116 = vld [vmem:[#allocation2 + $0x110] sm:$0xff]
    %v117 = vld [vmem:[#allocation2 + $0x118] sm:$0xff]
    %v118 = vld [vmem:[#allocation2 + $0x120] sm:$0xff]
    %v119 = vld [vmem:[#allocation2 + $0x128] sm:$0xff]
    %v120 = vld [vmem:[#allocation2 + $0x130] sm:$0xff]
    %v121 = vld [vmem:[#allocation2 + $0x138] sm:$0xff]
    %v122 = vld [vmem:[#allocation2 + $0x140] sm:$0xff]
    %v123 = vld [vmem:[#allocation2 + $0x148] sm:$0xff]
    %v124 = vld [vmem:[#allocation2 + $0x150] sm:$0xff]
    %v125 = vld [vmem:[#allocation2 + $0x158] sm:$0xff]
    %v126 = vld [vmem:[#allocation2 + $0x160] sm:$0xff]
    %v127 = vld [vmem:[#allocation2 + $0x168] sm:$0xff]
    %v128 = vld [vmem:[#allocation2 + $0x170] sm:$0xff]
    %v129 = vld [vmem:[#allocation2 + $0x178] sm:$0xff]
    %v130 = vld [vmem:[#allocation2 + $0x180] sm:$0xff]
    %v131 = vld [vmem:[#allocation2 + $0x188] sm:$0xff]
    %v132 = vld [vmem:[#allocation2 + $0x190] sm:$0xff]
    %v133 = vld [vmem:[#allocation2 + $0x198] sm:$0xff]
    %v134 = vld [vmem:[#allocation2 + $0x1a0] sm:$0xff]
    %v135 = vld [vmem:[#allocation2 + $0x1a8] sm:$0xff]
    %v136 = vld [vmem:[#allocation2 + $0x1b0] sm:$0xff]
    %v137 = vld [vmem:[#allocation2 + $0x1b8] sm:$0xff]
    %v138 = vld [vmem:[#allocation2 + $0x1c0] sm:$0xff]
    %v139 = vld [vmem:[#allocation2 + $0x1c8] sm:$0xff]
    %v140 = vld [vmem:[#allocation2 + $0x1d0] sm:$0xff]
    %v141 = vld [vmem:[#allocation2 + $0x1d8] sm:$0xff]
    %v142 = vld [vmem:[#allocation2 + $0x1e0] sm:$0xff]
    %v143 = vld [vmem:[#allocation2 + $0x1e8] sm:$0xff]
    %v144 = vld [vmem:[#allocation2 + $0x1f0] sm:$0xff]
    %v145 = vld [vmem:[#allocation2 + $0x1f8] sm:$0xff]
    %v146 = vpack.c.bf16 %v90, %v82
    %v147 = vpack.c.bf16 %v91, %v83
    %v148 = vpack.c.bf16 %v92, %v84
    %v149 = vpack.c.bf16 %v93, %v85
    %v150 = vpack.c.bf16 %v94, %v86
    %v151 = vpack.c.bf16 %v95, %v87
    %v152 = vpack.c.bf16 %v96, %v88
    %v153 = vpack.c.bf16 %v97, %v89
    %v154 = vpack.c.bf16 %v106, %v98
    %v155 = vpack.c.bf16 %v107, %v99
    %v156 = vpack.c.bf16 %v108, %v100
    %v157 = vpack.c.bf16 %v109, %v101
    %v158 = vpack.c.bf16 %v110, %v102
    %v159 = vpack.c.bf16 %v111, %v103
    %v160 = vpack.c.bf16 %v112, %v104
    %v161 = vpack.c.bf16 %v113, %v105
    %v162 = vpack.c.bf16 %v122, %v114
    %v163 = vpack.c.bf16 %v123, %v115
    %v164 = vpack.c.bf16 %v124, %v116
    %v165 = vpack.c.bf16 %v125, %v117
    %v166 = vpack.c.bf16 %v126, %v118
    %v167 = vpack.c.bf16 %v127, %v119
    %v168 = vpack.c.bf16 %v128, %v120
    %v169 = vpack.c.bf16 %v129, %v121
    %v170 = vpack.c.bf16 %v138, %v130
    %v171 = vpack.c.bf16 %v139, %v131
    %v172 = vpack.c.bf16 %v140, %v132
    %v173 = vpack.c.bf16 %v141, %v133
    %v174 = vpack.c.bf16 %v142, %v134
    %v175 = vpack.c.bf16 %v143, %v135
    %v176 = vpack.c.bf16 %v144, %v136
    %v177 = vpack.c.bf16 %v145, %v137
    %v178 = vld [vmem:[#allocation5] sm:$0xf]
    %v179 = vld [vmem:[#allocation5 + $0x4] sm:$0xf]
    %v180 = vld [vmem:[#allocation5 + $0x8] sm:$0xf]
    %v181 = vld [vmem:[#allocation5 + $0xc] sm:$0xf]
    %v182 = vld [vmem:[#allocation5 + $0x10] sm:$0xf]
    %v183 = vld [vmem:[#allocation5 + $0x14] sm:$0xf]
    %v184 = vld [vmem:[#allocation5 + $0x18] sm:$0xf]
    %v185 = vld [vmem:[#allocation5 + $0x1c] sm:$0xf]
    %v186 = vld [vmem:[#allocation5 + $0x20] sm:$0xf]
    %v187 = vld [vmem:[#allocation5 + $0x24] sm:$0xf]
    %v188 = vld [vmem:[#allocation5 + $0x28] sm:$0xf]
    %v189 = vld [vmem:[#allocation5 + $0x2c] sm:$0xf]
    %v190 = vld [vmem:[#allocation5 + $0x30] sm:$0xf]
    %v191 = vld [vmem:[#allocation5 + $0x34] sm:$0xf]
    %v192 = vld [vmem:[#allocation5 + $0x38] sm:$0xf]
    %v193 = vld [vmem:[#allocation5 + $0x3c] sm:$0xf]
    %v194 = vld [vmem:[#allocation5 + $0x40] sm:$0xf]
    %v195 = vld [vmem:[#allocation5 + $0x44] sm:$0xf]
    %v196 = vld [vmem:[#allocation5 + $0x48] sm:$0xf]
    %v197 = vld [vmem:[#allocation5 + $0x4c] sm:$0xf]
    %v198 = vld [vmem:[#allocation5 + $0x50] sm:$0xf]
    %v199 = vld [vmem:[#allocation5 + $0x54] sm:$0xf]
    %v200 = vld [vmem:[#allocation5 + $0x58] sm:$0xf]
    %v201 = vld [vmem:[#allocation5 + $0x5c] sm:$0xf]
    %v202 = vld [vmem:[#allocation5 + $0x60] sm:$0xf]
    %v203 = vld [vmem:[#allocation5 + $0x64] sm:$0xf]
    %v204 = vld [vmem:[#allocation5 + $0x68] sm:$0xf]
    %v205 = vld [vmem:[#allocation5 + $0x6c] sm:$0xf]
    %v206 = vld [vmem:[#allocation5 + $0x70] sm:$0xf]
    %v207 = vld [vmem:[#allocation5 + $0x74] sm:$0xf]
    %v208 = vld [vmem:[#allocation5 + $0x78] sm:$0xf]
    %v209 = vld [vmem:[#allocation5 + $0x7c] sm:$0xf]
    %v210 = vld [vmem:[#allocation5 + $0x80] sm:$0xf]
    %v211 = vld [vmem:[#allocation5 + $0x84] sm:$0xf]
    %v212 = vld [vmem:[#allocation5 + $0x88] sm:$0xf]
    %v213 = vld [vmem:[#allocation5 + $0x8c] sm:$0xf]
    %v214 = vld [vmem:[#allocation5 + $0x90] sm:$0xf]
    %v215 = vld [vmem:[#allocation5 + $0x94] sm:$0xf]
    %v216 = vld [vmem:[#allocation5 + $0x98] sm:$0xf]
    %v217 = vld [vmem:[#allocation5 + $0x9c] sm:$0xf]
    %v218 = vld [vmem:[#allocation5 + $0xa0] sm:$0xf]
    %v219 = vld [vmem:[#allocation5 + $0xa4] sm:$0xf]
    %v220 = vld [vmem:[#allocation5 + $0xa8] sm:$0xf]
    %v221 = vld [vmem:[#allocation5 + $0xac] sm:$0xf]
    %v222 = vld [vmem:[#allocation5 + $0xb0] sm:$0xf]
    %v223 = vld [vmem:[#allocation5 + $0xb4] sm:$0xf]
    %v224 = vld [vmem:[#allocation5 + $0xb8] sm:$0xf]
    %v225 = vld [vmem:[#allocation5 + $0xbc] sm:$0xf]
    %v226 = vld [vmem:[#allocation5 + $0xc0] sm:$0xf]
    %v227 = vld [vmem:[#allocation5 + $0xc4] sm:$0xf]
    %v228 = vld [vmem:[#allocation5 + $0xc8] sm:$0xf]
    %v229 = vld [vmem:[#allocation5 + $0xcc] sm:$0xf]
    %v230 = vld [vmem:[#allocation5 + $0xd0] sm:$0xf]
    %v231 = vld [vmem:[#allocation5 + $0xd4] sm:$0xf]
    %v232 = vld [vmem:[#allocation5 + $0xd8] sm:$0xf]
    %v233 = vld [vmem:[#allocation5 + $0xdc] sm:$0xf]
    %v234 = vld [vmem:[#allocation5 + $0xe0] sm:$0xf]
    %v235 = vld [vmem:[#allocation5 + $0xe4] sm:$0xf]
    %v236 = vld [vmem:[#allocation5 + $0xe8] sm:$0xf]
    %v237 = vld [vmem:[#allocation5 + $0xec] sm:$0xf]
    %v238 = vld [vmem:[#allocation5 + $0xf0] sm:$0xf]
    %v239 = vld [vmem:[#allocation5 + $0xf4] sm:$0xf]
    %v240 = vld [vmem:[#allocation5 + $0xf8] sm:$0xf]
    %v241 = vld [vmem:[#allocation5 + $0xfc] sm:$0xf]
    %v242 = vld [vmem:[#allocation5 + $0x100] sm:$0xf]
    %v243 = vld [vmem:[#allocation5 + $0x104] sm:$0xf]
    %v244 = vld [vmem:[#allocation5 + $0x108] sm:$0xf]
    %v245 = vld [vmem:[#allocation5 + $0x10c] sm:$0xf]
    %v246 = vld [vmem:[#allocation5 + $0x110] sm:$0xf]
    %v247 = vld [vmem:[#allocation5 + $0x114] sm:$0xf]
    %v248 = vld [vmem:[#allocation5 + $0x118] sm:$0xf]
    %v249 = vld [vmem:[#allocation5 + $0x11c] sm:$0xf]
    %v250 = vld [vmem:[#allocation5 + $0x120] sm:$0xf]
    %v251 = vld [vmem:[#allocation5 + $0x124] sm:$0xf]
    %v252 = vld [vmem:[#allocation5 + $0x128] sm:$0xf]
    %v253 = vld [vmem:[#allocation5 + $0x12c] sm:$0xf]
    %v254 = vld [vmem:[#allocation5 + $0x130] sm:$0xf]
    %v255 = vld [vmem:[#allocation5 + $0x134] sm:$0xf]
    %v256 = vld [vmem:[#allocation5 + $0x138] sm:$0xf]
    %v257 = vld [vmem:[#allocation5 + $0x13c] sm:$0xf]
    %v258 = vld [vmem:[#allocation5 + $0x140] sm:$0xf]
    %v259 = vld [vmem:[#allocation5 + $0x144] sm:$0xf]
    %v260 = vld [vmem:[#allocation5 + $0x148] sm:$0xf]
    %v261 = vld [vmem:[#allocation5 + $0x14c] sm:$0xf]
    %v262 = vld [vmem:[#allocation5 + $0x150] sm:$0xf]
    %v263 = vld [vmem:[#allocation5 + $0x154] sm:$0xf]
    %v264 = vld [vmem:[#allocation5 + $0x158] sm:$0xf]
    %v265 = vld [vmem:[#allocation5 + $0x15c] sm:$0xf]
    %v266 = vld [vmem:[#allocation5 + $0x160] sm:$0xf]
    %v267 = vld [vmem:[#allocation5 + $0x164] sm:$0xf]
    %v268 = vld [vmem:[#allocation5 + $0x168] sm:$0xf]
    %v269 = vld [vmem:[#allocation5 + $0x16c] sm:$0xf]
    %v270 = vld [vmem:[#allocation5 + $0x170] sm:$0xf]
    %v271 = vld [vmem:[#allocation5 + $0x174] sm:$0xf]
    %v272 = vld [vmem:[#allocation5 + $0x178] sm:$0xf]
    %v273 = vld [vmem:[#allocation5 + $0x17c] sm:$0xf]
    %v274 = vld [vmem:[#allocation5 + $0x180] sm:$0xf]
    %v275 = vld [vmem:[#allocation5 + $0x184] sm:$0xf]
    %v276 = vld [vmem:[#allocation5 + $0x188] sm:$0xf]
    %v277 = vld [vmem:[#allocation5 + $0x18c] sm:$0xf]
    %v278 = vld [vmem:[#allocation5 + $0x190] sm:$0xf]
    %v279 = vld [vmem:[#allocation5 + $0x194] sm:$0xf]
    %v280 = vld [vmem:[#allocation5 + $0x198] sm:$0xf]
    %v281 = vld [vmem:[#allocation5 + $0x19c] sm:$0xf]
    %v282 = vld [vmem:[#allocation5 + $0x1a0] sm:$0xf]
    %v283 = vld [vmem:[#allocation5 + $0x1a4] sm:$0xf]
    %v284 = vld [vmem:[#allocation5 + $0x1a8] sm:$0xf]
    %v285 = vld [vmem:[#allocation5 + $0x1ac] sm:$0xf]
    %v286 = vld [vmem:[#allocation5 + $0x1b0] sm:$0xf]
    %v287 = vld [vmem:[#allocation5 + $0x1b4] sm:$0xf]
    %v288 = vld [vmem:[#allocation5 + $0x1b8] sm:$0xf]
    %v289 = vld [vmem:[#allocation5 + $0x1bc] sm:$0xf]
    %v290 = vld [vmem:[#allocation5 + $0x1c0] sm:$0xf]
    %v291 = vld [vmem:[#allocation5 + $0x1c4] sm:$0xf]
    %v292 = vld [vmem:[#allocation5 + $0x1c8] sm:$0xf]
    %v293 = vld [vmem:[#allocation5 + $0x1cc] sm:$0xf]
    %v294 = vld [vmem:[#allocation5 + $0x1d0] sm:$0xf]
    %v295 = vld [vmem:[#allocation5 + $0x1d4] sm:$0xf]
    %v296 = vld [vmem:[#allocation5 + $0x1d8] sm:$0xf]
    %v297 = vld [vmem:[#allocation5 + $0x1dc] sm:$0xf]
    %v298 = vld [vmem:[#allocation5 + $0x1e0] sm:$0xf]
    %v299 = vld [vmem:[#allocation5 + $0x1e4] sm:$0xf]
    %v300 = vld [vmem:[#allocation5 + $0x1e8] sm:$0xf]
    %v301 = vld [vmem:[#allocation5 + $0x1ec] sm:$0xf]
    %v302 = vld [vmem:[#allocation5 + $0x1f0] sm:$0xf]
    %v303 = vld [vmem:[#allocation5 + $0x1f4] sm:$0x1]
    %v304 = vunpack.c.l.bf16 %v303
    %v305 = vperm.slane %v304, 0
    %v431 = vunpack.c.l.b16 %v178
    %v432 = vunpack.c.l.b16 %v179
    %v433 = vunpack.c.l.b16 %v180
    %v434 = vunpack.c.l.b16 %v181
    %v435 = vunpack.c.l.b16 %v182
    %v436 = vunpack.c.l.b16 %v183
    %v437 = vunpack.c.l.b16 %v184
    %v438 = vunpack.c.l.b16 %v185
    %v439 = vunpack.c.l.b16 %v186
    %v440 = vunpack.c.l.b16 %v187
    %v441 = vunpack.c.l.b16 %v188
    %v442 = vunpack.c.l.b16 %v189
    %v443 = vunpack.c.l.b16 %v190
    %v444 = vunpack.c.l.b16 %v191
    %v445 = vunpack.c.l.b16 %v192
    %v446 = vunpack.c.l.b16 %v193
    %v447 = vunpack.c.l.b16 %v194
    %v448 = vunpack.c.l.b16 %v195
    %v449 = vunpack.c.l.b16 %v196
    %v450 = vunpack.c.l.b16 %v197
    %v451 = vunpack.c.l.b16 %v198
    %v452 = vunpack.c.l.b16 %v199
    %v453 = vunpack.c.l.b16 %v200
    %v454 = vunpack.c.l.b16 %v201
    %v455 = vunpack.c.l.b16 %v202
    %v456 = vunpack.c.l.b16 %v203
    %v457 = vunpack.c.l.b16 %v204
    %v458 = vunpack.c.l.b16 %v205
    %v459 = vunpack.c.l.b16 %v206
    %v460 = vunpack.c.l.b16 %v207
    %v461 = vunpack.c.l.b16 %v208
    %v462 = vunpack.c.l.b16 %v209
    %v463 = vunpack.c.l.b16 %v210
    %v464 = vunpack.c.l.b16 %v211
    %v465 = vunpack.c.l.b16 %v212
    %v466 = vunpack.c.l.b16 %v213
    %v467 = vunpack.c.l.b16 %v214
    %v468 = vunpack.c.l.b16 %v215
    %v469 = vunpack.c.l.b16 %v216
    %v470 = vunpack.c.l.b16 %v217
    %v471 = vunpack.c.l.b16 %v218
    %v472 = vunpack.c.l.b16 %v219
    %v473 = vunpack.c.l.b16 %v220
    %v474 = vunpack.c.l.b16 %v221
    %v475 = vunpack.c.l.b16 %v222
    %v476 = vunpack.c.l.b16 %v223
    %v477 = vunpack.c.l.b16 %v224
    %v478 = vunpack.c.l.b16 %v225
    %v479 = vunpack.c.l.b16 %v226
    %v480 = vunpack.c.l.b16 %v227
    %v481 = vunpack.c.l.b16 %v228
    %v482 = vunpack.c.l.b16 %v229
    %v483 = vunpack.c.l.b16 %v230
    %v484 = vunpack.c.l.b16 %v231
    %v485 = vunpack.c.l.b16 %v232
    %v486 = vunpack.c.l.b16 %v233
    %v487 = vunpack.c.l.b16 %v234
    %v488 = vunpack.c.l.b16 %v235
    %v489 = vunpack.c.l.b16 %v236
    %v490 = vunpack.c.l.b16 %v237
    %v491 = vunpack.c.l.b16 %v238
    %v492 = vunpack.c.l.b16 %v239
    %v493 = vunpack.c.l.b16 %v240
    %v494 = vunpack.c.l.b16 %v241
    %v495 = vunpack.c.l.b16 %v242
    %v496 = vunpack.c.l.b16 %v243
    %v497 = vunpack.c.l.b16 %v244
    %v498 = vunpack.c.l.b16 %v245
    %v499 = vunpack.c.l.b16 %v246
    %v500 = vunpack.c.l.b16 %v247
    %v501 = vunpack.c.l.b16 %v248
    %v502 = vunpack.c.l.b16 %v249
    %v503 = vunpack.c.l.b16 %v250
    %v504 = vunpack.c.l.b16 %v251
    %v505 = vunpack.c.l.b16 %v252
    %v506 = vunpack.c.l.b16 %v253
    %v507 = vunpack.c.l.b16 %v254
    %v508 = vunpack.c.l.b16 %v255
    %v509 = vunpack.c.l.b16 %v256
    %v510 = vunpack.c.l.b16 %v257
    %v511 = vunpack.c.l.b16 %v258
    %v512 = vunpack.c.l.b16 %v259
    %v513 = vunpack.c.l.b16 %v260
    %v514 = vunpack.c.l.b16 %v261
    %v515 = vunpack.c.l.b16 %v262
    %v516 = vunpack.c.l.b16 %v263
    %v517 = vunpack.c.l.b16 %v264
    %v518 = vunpack.c.l.b16 %v265
    %v519 = vunpack.c.l.b16 %v266
    %v520 = vunpack.c.l.b16 %v267
    %v521 = vunpack.c.l.b16 %v268
    %v522 = vunpack.c.l.b16 %v269
    %v523 = vunpack.c.l.b16 %v270
    %v524 = vunpack.c.l.b16 %v271
    %v525 = vunpack.c.l.b16 %v272
    %v526 = vunpack.c.l.b16 %v273
    %v527 = vunpack.c.l.b16 %v274
    %v528 = vunpack.c.l.b16 %v275
    %v529 = vunpack.c.l.b16 %v276
    %v530 = vunpack.c.l.b16 %v277
    %v531 = vunpack.c.l.b16 %v278
    %v532 = vunpack.c.l.b16 %v279
    %v533 = vunpack.c.l.b16 %v280
    %v534 = vunpack.c.l.b16 %v281
    %v535 = vunpack.c.l.b16 %v282
    %v536 = vunpack.c.l.b16 %v283
    %v537 = vunpack.c.l.b16 %v284
    %v538 = vunpack.c.l.b16 %v285
    %v539 = vunpack.c.l.b16 %v286
    %v540 = vunpack.c.l.b16 %v287
    %v541 = vunpack.c.l.b16 %v288
    %v542 = vunpack.c.l.b16 %v289
    %v543 = vunpack.c.l.b16 %v290
    %v544 = vunpack.c.l.b16 %v291
    %v545 = vunpack.c.l.b16 %v292
    %v546 = vunpack.c.l.b16 %v293
    %v547 = vunpack.c.l.b16 %v294
    %v548 = vunpack.c.l.b16 %v295
    %v549 = vunpack.c.l.b16 %v296
    %v550 = vunpack.c.l.b16 %v297
    %v551 = vunpack.c.l.b16 %v298
    %v552 = vunpack.c.l.b16 %v299
    %v553 = vunpack.c.l.b16 %v300
    %v554 = vunpack.c.l.b16 %v301
    %v555 = vunpack.c.l.b16 %v302
    %v556 = vpack.c.b16 %v432, %v431
    %v557 = vpack.c.b16 %v434, %v433
    %v558 = vpack.c.b16 %v436, %v435
    %v559 = vpack.c.b16 %v438, %v437
    %v560 = vpack.c.b16 %v440, %v439
    %v561 = vpack.c.b16 %v442, %v441
    %v562 = vpack.c.b16 %v444, %v443
    %v563 = vpack.c.b16 %v446, %v445
    %v564 = vpack.c.b16 %v448, %v447
    %v565 = vpack.c.b16 %v450, %v449
    %v566 = vpack.c.b16 %v452, %v451
    %v567 = vpack.c.b16 %v454, %v453
    %v568 = vpack.c.b16 %v456, %v455
    %v569 = vpack.c.b16 %v458, %v457
    %v570 = vpack.c.b16 %v460, %v459
    %v571 = vpack.c.b16 %v462, %v461
    %v572 = vpack.c.b16 %v464, %v463
    %v573 = vpack.c.b16 %v466, %v465
    %v574 = vpack.c.b16 %v468, %v467
    %v575 = vpack.c.b16 %v470, %v469
    %v576 = vpack.c.b16 %v472, %v471
    %v577 = vpack.c.b16 %v474, %v473
    %v578 = vpack.c.b16 %v476, %v475
    %v579 = vpack.c.b16 %v478, %v477
    %v580 = vpack.c.b16 %v480, %v479
    %v581 = vpack.c.b16 %v482, %v481
    %v582 = vpack.c.b16 %v484, %v483
    %v583 = vpack.c.b16 %v486, %v485
    %v584 = vpack.c.b16 %v488, %v487
    %v585 = vpack.c.b16 %v490, %v489
    %v586 = vpack.c.b16 %v492, %v491
    %v587 = vpack.c.b16 %v494, %v493
    %v588 = vpack.c.b16 %v496, %v495
    %v589 = vpack.c.b16 %v498, %v497
    %v590 = vpack.c.b16 %v500, %v499
    %v591 = vpack.c.b16 %v502, %v501
    %v592 = vpack.c.b16 %v504, %v503
    %v593 = vpack.c.b16 %v506, %v505
    %v594 = vpack.c.b16 %v508, %v507
    %v595 = vpack.c.b16 %v510, %v509
    %v596 = vpack.c.b16 %v512, %v511
    %v597 = vpack.c.b16 %v514, %v513
    %v598 = vpack.c.b16 %v516, %v515
    %v599 = vpack.c.b16 %v518, %v517
    %v600 = vpack.c.b16 %v520, %v519
    %v601 = vpack.c.b16 %v522, %v521
    %v602 = vpack.c.b16 %v524, %v523
    %v603 = vpack.c.b16 %v526, %v525
    %v604 = vpack.c.b16 %v528, %v527
    %v605 = vpack.c.b16 %v530, %v529
    %v606 = vpack.c.b16 %v532, %v531
    %v607 = vpack.c.b16 %v534, %v533
    %v608 = vpack.c.b16 %v536, %v535
    %v609 = vpack.c.b16 %v538, %v537
    %v610 = vpack.c.b16 %v540, %v539
    %v611 = vpack.c.b16 %v542, %v541
    %v612 = vpack.c.b16 %v544, %v543
    %v613 = vpack.c.b16 %v546, %v545
    %v614 = vpack.c.b16 %v548, %v547
    %v615 = vpack.c.b16 %v550, %v549
    %v616 = vpack.c.b16 %v552, %v551
    %v617 = vpack.c.b16 %v554, %v553
    %v618 = vpack.c.b16 %v555, %v555
    %vm681 = vcmask 850944
    %v683 = vsel %vm681, %v153, 0
    %v686 = vsel %vm681, %v161, 0
    %v689 = vsel %vm681, %v169, 0
    %v692 = vsel %vm681, %v177, 0
    %vm694 = vcmask 1043456
    %v696 = vsel %vm694, %v618, 0
    %698 = vmatpush.bf16.msra.mxu0 %v563
    %699 = vmatpush.bf16.msra.mxu0 %v562
    %700 = vmatpush.bf16.msra.mxu0 %v561
    %701 = vmatpush.bf16.msra.mxu0 %v560
    %702 = vmatpush.bf16.msra.mxu0 %v559
    %703 = vmatpush.bf16.msra.mxu0 %v558
    %704 = vmatpush.bf16.msra.mxu0 %v557
    %705 = vmatpush.bf16.msra.mxu0 %v556
    %706 = vmatmul.bf16.gmra.mxu0 %v146
    %v707 = vpop.f32.mrf.mxu0
    %v708 = vadd.f32 %v305, %v707
    %v709 = vpop.f32.mrf.mxu0
    %v710 = vadd.f32 %v305, %v709
    %711 = vmatmul.bf16.gmra.mxu0 %v154
    %v712 = vpop.f32.mrf.mxu0
    %v713 = vadd.f32 %v305, %v712
    %v714 = vpop.f32.mrf.mxu0
    %v715 = vadd.f32 %v305, %v714
    %716 = vmatmul.bf16.gmra.mxu0 %v162
    %v717 = vpop.f32.mrf.mxu0
    %v718 = vadd.f32 %v305, %v717
    %v719 = vpop.f32.mrf.mxu0
    %v720 = vadd.f32 %v305, %v719
    %721 = vmatmul.bf16.gmra.mxu0 %v170
    %v722 = vpop.f32.mrf.mxu0
    %v723 = vadd.f32 %v305, %v722
    %v724 = vpop.f32.mrf.mxu0
    %v725 = vadd.f32 %v305, %v724
    %726 = vdwg.mxu0
    %727 = vmatpush.bf16.msra.mxu0 %v571
    %728 = vmatpush.bf16.msra.mxu0 %v570
    %729 = vmatpush.bf16.msra.mxu0 %v569
    %730 = vmatpush.bf16.msra.mxu0 %v568
    %731 = vmatpush.bf16.msra.mxu0 %v567
    %732 = vmatpush.bf16.msra.mxu0 %v566
    %733 = vmatpush.bf16.msra.mxu0 %v565
    %734 = vmatpush.bf16.msra.mxu0 %v564
    %735 = vmatmul.bf16.gmra.mxu0 %v147
    %v736 = vpop.f32.mrf.mxu0
    %v737 = vadd.f32 %v708, %v736
    %v738 = vpop.f32.mrf.mxu0
    %v739 = vadd.f32 %v710, %v738
    %740 = vmatmul.bf16.gmra.mxu0 %v155
    %v741 = vpop.f32.mrf.mxu0
    %v742 = vadd.f32 %v713, %v741
    %v743 = vpop.f32.mrf.mxu0
    %v744 = vadd.f32 %v715, %v743
    %745 = vmatmul.bf16.gmra.mxu0 %v163
    %v746 = vpop.f32.mrf.mxu0
    %v747 = vadd.f32 %v718, %v746
    %v748 = vpop.f32.mrf.mxu0
    %v749 = vadd.f32 %v720, %v748
    %750 = vmatmul.bf16.gmra.mxu0 %v171
    %v751 = vpop.f32.mrf.mxu0
    %v752 = vadd.f32 %v723, %v751
    %v753 = vpop.f32.mrf.mxu0
    %v754 = vadd.f32 %v725, %v753
    %755 = vdwg.mxu0
    %756 = vmatpush.bf16.msra.mxu0 %v579
    %757 = vmatpush.bf16.msra.mxu0 %v578
    %758 = vmatpush.bf16.msra.mxu0 %v577
    %759 = vmatpush.bf16.msra.mxu0 %v576
    %760 = vmatpush.bf16.msra.mxu0 %v575
    %761 = vmatpush.bf16.msra.mxu0 %v574
    %762 = vmatpush.bf16.msra.mxu0 %v573
    %763 = vmatpush.bf16.msra.mxu0 %v572
    %764 = vmatmul.bf16.gmra.mxu0 %v148
    %v765 = vpop.f32.mrf.mxu0
    %v766 = vadd.f32 %v737, %v765
    %v767 = vpop.f32.mrf.mxu0
    %v768 = vadd.f32 %v739, %v767
    %769 = vmatmul.bf16.gmra.mxu0 %v156
    %v770 = vpop.f32.mrf.mxu0
    %v771 = vadd.f32 %v742, %v770
    %v772 = vpop.f32.mrf.mxu0
    %v773 = vadd.f32 %v744, %v772
    %774 = vmatmul.bf16.gmra.mxu0 %v164
    %v775 = vpop.f32.mrf.mxu0
    %v776 = vadd.f32 %v747, %v775
    %v777 = vpop.f32.mrf.mxu0
    %v778 = vadd.f32 %v749, %v777
    %779 = vmatmul.bf16.gmra.mxu0 %v172
    %v780 = vpop.f32.mrf.mxu0
    %v781 = vadd.f32 %v752, %v780
    %v782 = vpop.f32.mrf.mxu0
    %v783 = vadd.f32 %v754, %v782
    %784 = vdwg.mxu0
    %785 = vmatpush.bf16.msra.mxu0 %v587
    %786 = vmatpush.bf16.msra.mxu0 %v586
    %787 = vmatpush.bf16.msra.mxu0 %v585
    %788 = vmatpush.bf16.msra.mxu0 %v584
    %789 = vmatpush.bf16.msra.mxu0 %v583
    %790 = vmatpush.bf16.msra.mxu0 %v582
    %791 = vmatpush.bf16.msra.mxu0 %v581
    %792 = vmatpush.bf16.msra.mxu0 %v580
    %793 = vmatmul.bf16.gmra.mxu0 %v149
    %v794 = vpop.f32.mrf.mxu0
    %v795 = vadd.f32 %v766, %v794
    %v796 = vpop.f32.mrf.mxu0
    %v797 = vadd.f32 %v768, %v796
    %798 = vmatmul.bf16.gmra.mxu0 %v157
    %v799 = vpop.f32.mrf.mxu0
    %v800 = vadd.f32 %v771, %v799
    %v801 = vpop.f32.mrf.mxu0
    %v802 = vadd.f32 %v773, %v801
    %803 = vmatmul.bf16.gmra.mxu0 %v165
    %v804 = vpop.f32.mrf.mxu0
    %v805 = vadd.f32 %v776, %v804
    %v806 = vpop.f32.mrf.mxu0
    %v807 = vadd.f32 %v778, %v806
    %808 = vmatmul.bf16.gmra.mxu0 %v173
    %v809 = vpop.f32.mrf.mxu0
    %v810 = vadd.f32 %v781, %v809
    %v811 = vpop.f32.mrf.mxu0
    %v812 = vadd.f32 %v783, %v811
    %813 = vdwg.mxu0
    %814 = vmatpush.bf16.msra.mxu0 %v595
    %815 = vmatpush.bf16.msra.mxu0 %v594
    %816 = vmatpush.bf16.msra.mxu0 %v593
    %817 = vmatpush.bf16.msra.mxu0 %v592
    %818 = vmatpush.bf16.msra.mxu0 %v591
    %819 = vmatpush.bf16.msra.mxu0 %v590
    %820 = vmatpush.bf16.msra.mxu0 %v589
    %821 = vmatpush.bf16.msra.mxu0 %v588
    %822 = vmatmul.bf16.gmra.mxu0 %v150
    %v823 = vpop.f32.mrf.mxu0
    %v824 = vadd.f32 %v795, %v823
    %v825 = vpop.f32.mrf.mxu0
    %v826 = vadd.f32 %v797, %v825
    %827 = vmatmul.bf16.gmra.mxu0 %v158
    %v828 = vpop.f32.mrf.mxu0
    %v829 = vadd.f32 %v800, %v828
    %v830 = vpop.f32.mrf.mxu0
    %v831 = vadd.f32 %v802, %v830
    %832 = vmatmul.bf16.gmra.mxu0 %v166
    %v833 = vpop.f32.mrf.mxu0
    %v834 = vadd.f32 %v805, %v833
    %v835 = vpop.f32.mrf.mxu0
    %v836 = vadd.f32 %v807, %v835
    %837 = vmatmul.bf16.gmra.mxu0 %v174
    %v838 = vpop.f32.mrf.mxu0
    %v839 = vadd.f32 %v810, %v838
    %v840 = vpop.f32.mrf.mxu0
    %v841 = vadd.f32 %v812, %v840
    %842 = vdwg.mxu0
    %843 = vmatpush.bf16.msra.mxu0 %v603
    %844 = vmatpush.bf16.msra.mxu0 %v602
    %845 = vmatpush.bf16.msra.mxu0 %v601
    %846 = vmatpush.bf16.msra.mxu0 %v600
    %847 = vmatpush.bf16.msra.mxu0 %v599
    %848 = vmatpush.bf16.msra.mxu0 %v598
    %849 = vmatpush.bf16.msra.mxu0 %v597
    %850 = vmatpush.bf16.msra.mxu0 %v596
    %851 = vmatmul.bf16.gmra.mxu0 %v151
    %v852 = vpop.f32.mrf.mxu0
    %v853 = vadd.f32 %v824, %v852
    %v854 = vpop.f32.mrf.mxu0
    %v855 = vadd.f32 %v826, %v854
    %856 = vmatmul.bf16.gmra.mxu0 %v159
    %v857 = vpop.f32.mrf.mxu0
    %v858 = vadd.f32 %v829, %v857
    %v859 = vpop.f32.mrf.mxu0
    %v860 = vadd.f32 %v831, %v859
    %861 = vmatmul.bf16.gmra.mxu0 %v167
    %v862 = vpop.f32.mrf.mxu0
    %v863 = vadd.f32 %v834, %v862
    %v864 = vpop.f32.mrf.mxu0
    %v865 = vadd.f32 %v836, %v864
    %866 = vmatmul.bf16.gmra.mxu0 %v175
    %v867 = vpop.f32.mrf.mxu0
    %v868 = vadd.f32 %v839, %v867
    %v869 = vpop.f32.mrf.mxu0
    %v870 = vadd.f32 %v841, %v869
    %871 = vdwg.mxu0
    %872 = vmatpush.bf16.msra.mxu0 %v611
    %873 = vmatpush.bf16.msra.mxu0 %v610
    %874 = vmatpush.bf16.msra.mxu0 %v609
    %875 = vmatpush.bf16.msra.mxu0 %v608
    %876 = vmatpush.bf16.msra.mxu0 %v607
    %877 = vmatpush.bf16.msra.mxu0 %v606
    %878 = vmatpush.bf16.msra.mxu0 %v605
    %879 = vmatpush.bf16.msra.mxu0 %v604
    %880 = vmatmul.bf16.gmra.mxu0 %v152
    %v881 = vpop.f32.mrf.mxu0
    %v882 = vadd.f32 %v853, %v881
    %v883 = vpop.f32.mrf.mxu0
    %v884 = vadd.f32 %v855, %v883
    %885 = vmatmul.bf16.gmra.mxu0 %v160
    %v886 = vpop.f32.mrf.mxu0
    %v887 = vadd.f32 %v858, %v886
    %v888 = vpop.f32.mrf.mxu0
    %v889 = vadd.f32 %v860, %v888
    %890 = vmatmul.bf16.gmra.mxu0 %v168
    %v891 = vpop.f32.mrf.mxu0
    %v892 = vadd.f32 %v863, %v891
    %v893 = vpop.f32.mrf.mxu0
    %v894 = vadd.f32 %v865, %v893
    %895 = vmatmul.bf16.gmra.mxu0 %v176
    %v896 = vpop.f32.mrf.mxu0
    %v897 = vadd.f32 %v868, %v896
    %v898 = vpop.f32.mrf.mxu0
    %v899 = vadd.f32 %v870, %v898
    %900 = vdwg.mxu0
    %901 = vmatpush.bf16.msra.mxu0 0
    %902 = vmatpush.bf16.msra.mxu0 %v696
    %903 = vmatpush.bf16.msra.mxu0 %v617
    %904 = vmatpush.bf16.msra.mxu0 %v616
    %905 = vmatpush.bf16.msra.mxu0 %v615
    %906 = vmatpush.bf16.msra.mxu0 %v614
    %907 = vmatpush.bf16.msra.mxu0 %v613
    %908 = vmatpush.bf16.msra.mxu0 %v612
    %909 = vmatmul.bf16.gmra.mxu0 %v683
    %v910 = vpop.f32.mrf.mxu0
    %v911 = vadd.f32 %v882, %v910
    %v912 = vpop.f32.mrf.mxu0
    %v913 = vadd.f32 %v884, %v912
    %914 = vmatmul.bf16.gmra.mxu0 %v686
    %v915 = vpop.f32.mrf.mxu0
    %v916 = vadd.f32 %v887, %v915
    %v917 = vpop.f32.mrf.mxu0
    %v918 = vadd.f32 %v889, %v917
    %919 = vmatmul.bf16.gmra.mxu0 %v689
    %v920 = vpop.f32.mrf.mxu0
    %v921 = vadd.f32 %v892, %v920
    %v922 = vpop.f32.mrf.mxu0
    %v923 = vadd.f32 %v894, %v922
    %924 = vmatmul.bf16.gmra.mxu0 %v692
    %v925 = vpop.f32.mrf.mxu0
    %v926 = vadd.f32 %v897, %v925
    %v927 = vpop.f32.mrf.mxu0
    %v928 = vadd.f32 %v899, %v927
    %929 = vdwg.mxu0
    %v930 = vmax.f32 %v911, 0.0
    %v931 = vmax.f32 %v913, 0.0
    %v932 = vmax.f32 %v916, 0.0
    %v933 = vmax.f32 %v918, 0.0
    %v934 = vmax.f32 %v921, 0.0
    %v935 = vmax.f32 %v923, 0.0
    %v936 = vmax.f32 %v926, 0.0
    %v937 = vmax.f32 %v928, 0.0
    %v938 = vld [vmem:[#allocation7] sm:$0xf]
    %v939 = vld [vmem:[#allocation7 + $0x4] sm:$0xf]
    %v940 = vld [vmem:[#allocation7 + $0x8] sm:$0xf]
    %v941 = vld [vmem:[#allocation7 + $0xc] sm:$0xf]
    %v942 = vld [vmem:[#allocation7 + $0x10] sm:$0xf]
    %v943 = vld [vmem:[#allocation7 + $0x14] sm:$0xf]
    %v944 = vld [vmem:[#allocation7 + $0x18] sm:$0xf]
    %v945 = vld [vmem:[#allocation7 + $0x1c] sm:$0xf]
    %v946 = vld [vmem:[#allocation7 + $0x20] sm:$0xf]
    %v947 = vld [vmem:[#allocation7 + $0x24] sm:$0xf]
    %v948 = vld [vmem:[#allocation7 + $0x28] sm:$0xf]
    %v949 = vld [vmem:[#allocation7 + $0x2c] sm:$0xf]
    %v950 = vld [vmem:[#allocation7 + $0x30] sm:$0xf]
    %v951 = vld [vmem:[#allocation7 + $0x34] sm:$0xf]
    %v952 = vld [vmem:[#allocation7 + $0x38] sm:$0xf]
    %v953 = vld [vmem:[#allocation7 + $0x3c] sm:$0xf]
    %v954 = vpack.c.bf16 %v931, %v930
    %v955 = vpack.c.bf16 %v933, %v932
    %v956 = vpack.c.bf16 %v935, %v934
    %v957 = vpack.c.bf16 %v937, %v936
    %v974 = vunpack.c.l.b16 %v938
    %v975 = vunpack.c.l.b16 %v939
    %v976 = vunpack.c.l.b16 %v940
    %v977 = vunpack.c.l.b16 %v941
    %v978 = vunpack.c.l.b16 %v942
    %v979 = vunpack.c.l.b16 %v943
    %v980 = vunpack.c.l.b16 %v944
    %v981 = vunpack.c.l.b16 %v945
    %v982 = vunpack.c.l.b16 %v946
    %v983 = vunpack.c.l.b16 %v947
    %v984 = vunpack.c.l.b16 %v948
    %v985 = vunpack.c.l.b16 %v949
    %v986 = vunpack.c.l.b16 %v950
    %v987 = vunpack.c.l.b16 %v951
    %v988 = vunpack.c.l.b16 %v952
    %v989 = vunpack.c.l.b16 %v953
    %v990 = vpack.c.b16 %v975, %v974
    %v991 = vpack.c.b16 %v977, %v976
    %v992 = vpack.c.b16 %v979, %v978
    %v993 = vpack.c.b16 %v981, %v980
    %v994 = vpack.c.b16 %v983, %v982
    %v995 = vpack.c.b16 %v985, %v984
    %v996 = vpack.c.b16 %v987, %v986
    %v997 = vpack.c.b16 %v989, %v988
    %1006 = vmatpush.bf16.msra.mxu0 %v997
    %1007 = vmatpush.bf16.msra.mxu0 %v996
    %1008 = vmatpush.bf16.msra.mxu0 %v995
    %1009 = vmatpush.bf16.msra.mxu0 %v994
    %1010 = vmatpush.bf16.msra.mxu0 %v993
    %1011 = vmatpush.bf16.msra.mxu0 %v992
    %1012 = vmatpush.bf16.msra.mxu0 %v991
    %1013 = vmatpush.bf16.msra.mxu0 %v990
    %1014 = vmatmul.bf16.gmra.mxu0 %v954
    %v1015 = vpop.f32.mrf.mxu0
    %v1016 = vadd.f32 0.0, %v1015
    %v1017 = vpop.f32.mrf.mxu0
    %v1018 = vadd.f32 0.0, %v1017
    %1019 = vmatmul.bf16.gmra.mxu0 %v955
    %v1020 = vpop.f32.mrf.mxu0
    %v1021 = vadd.f32 0.0, %v1020
    %v1022 = vpop.f32.mrf.mxu0
    %v1023 = vadd.f32 0.0, %v1022
    %1024 = vmatmul.bf16.gmra.mxu0 %v956
    %v1025 = vpop.f32.mrf.mxu0
    %v1026 = vadd.f32 0.0, %v1025
    %v1027 = vpop.f32.mrf.mxu0
    %v1028 = vadd.f32 0.0, %v1027
    %1029 = vmatmul.bf16.gmra.mxu0 %v957
    %v1030 = vpop.f32.mrf.mxu0
    %v1031 = vadd.f32 0.0, %v1030
    %v1032 = vpop.f32.mrf.mxu0
    %v1033 = vadd.f32 0.0, %v1032
    %1034 = vdwg.mxu0
    %v1035 = vmax.f32 %v1016, 0.0
    %v1036 = vmax.f32 %v1018, 0.0
    %v1037 = vmax.f32 %v1021, 0.0
    %v1038 = vmax.f32 %v1023, 0.0
    %v1039 = vmax.f32 %v1026, 0.0
    %v1040 = vmax.f32 %v1028, 0.0
    %v1041 = vmax.f32 %v1031, 0.0
    %v1042 = vmax.f32 %v1033, 0.0
    %v1043 = vpack.c.bf16 %v1036, %v1035
    %v1044 = vpack.c.bf16 %v1038, %v1037
    %v1045 = vpack.c.bf16 %v1040, %v1039
    %v1046 = vpack.c.bf16 %v1042, %v1041
    %1047 = vmatpush.bf16.msra.mxu0 %v997
    %1048 = vmatpush.bf16.msra.mxu0 %v996
    %1049 = vmatpush.bf16.msra.mxu0 %v995
    %1050 = vmatpush.bf16.msra.mxu0 %v994
    %1051 = vmatpush.bf16.msra.mxu0 %v993
    %1052 = vmatpush.bf16.msra.mxu0 %v992
    %1053 = vmatpush.bf16.msra.mxu0 %v991
    %1054 = vmatpush.bf16.msra.mxu0 %v990
    %1055 = vmatmul.bf16.gmra.mxu0 %v1043
    %v1056 = vpop.f32.mrf.mxu0
    %v1057 = vadd.f32 0.0, %v1056
    %v1058 = vpop.f32.mrf.mxu0
    %v1059 = vadd.f32 0.0, %v1058
    %1060 = vmatmul.bf16.gmra.mxu0 %v1044
    %v1061 = vpop.f32.mrf.mxu0
    %v1062 = vadd.f32 0.0, %v1061
    %v1063 = vpop.f32.mrf.mxu0
    %v1064 = vadd.f32 0.0, %v1063
    %1065 = vmatmul.bf16.gmra.mxu0 %v1045
    %v1066 = vpop.f32.mrf.mxu0
    %v1067 = vadd.f32 0.0, %v1066
    %v1068 = vpop.f32.mrf.mxu0
    %v1069 = vadd.f32 0.0, %v1068
    %1070 = vmatmul.bf16.gmra.mxu0 %v1046
    %v1071 = vpop.f32.mrf.mxu0
    %v1072 = vadd.f32 0.0, %v1071
    %v1073 = vpop.f32.mrf.mxu0
    %v1074 = vadd.f32 0.0, %v1073
    %1075 = vdwg.mxu0
    %v1076 = vmax.f32 %v1057, 0.0
    %v1077 = vmax.f32 %v1059, 0.0
    %v1078 = vmax.f32 %v1062, 0.0
    %v1079 = vmax.f32 %v1064, 0.0
    %v1080 = vmax.f32 %v1067, 0.0
    %v1081 = vmax.f32 %v1069, 0.0
    %v1082 = vmax.f32 %v1072, 0.0
    %v1083 = vmax.f32 %v1074, 0.0
    %v1084 = vpack.c.bf16 %v1077, %v1076
    %v1085 = vpack.c.bf16 %v1079, %v1078
    %v1086 = vpack.c.bf16 %v1081, %v1080
    %v1087 = vpack.c.bf16 %v1083, %v1082
    %v1088 = vld [vmem:[#allocation8] sm:$0xf]
    %v1089 = vld [vmem:[#allocation8 + $0x4] sm:$0xf]
    %v1090 = vld [vmem:[#allocation8 + $0x8] sm:$0xf]
    %v1091 = vld [vmem:[#allocation8 + $0xc] sm:$0xf]
    %v1092 = vld [vmem:[#allocation8 + $0x10] sm:$0xf]
    %v1093 = vld [vmem:[#allocation8 + $0x14] sm:$0xf]
    %v1094 = vld [vmem:[#allocation8 + $0x18] sm:$0xf]
    %v1095 = vld [vmem:[#allocation8 + $0x1c] sm:$0xf]
    %v1096 = vld [vmem:[#allocation8 + $0x20] sm:$0xf]
    %v1097 = vld [vmem:[#allocation8 + $0x24] sm:$0xf]
    %v1098 = vld [vmem:[#allocation8 + $0x28] sm:$0xf]
    %v1099 = vld [vmem:[#allocation8 + $0x2c] sm:$0xf]
    %v1100 = vld [vmem:[#allocation8 + $0x30] sm:$0xf]
    %v1101 = vld [vmem:[#allocation8 + $0x34] sm:$0xf]
    %v1102 = vld [vmem:[#allocation8 + $0x38] sm:$0xf]
    %v1103 = vld [vmem:[#allocation8 + $0x3c] sm:$0xf]
    %v1120 = vunpack.c.l.b16 %v1088
    %v1121 = vunpack.c.l.b16 %v1089
    %v1122 = vunpack.c.l.b16 %v1090
    %v1123 = vunpack.c.l.b16 %v1091
    %v1124 = vunpack.c.l.b16 %v1092
    %v1125 = vunpack.c.l.b16 %v1093
    %v1126 = vunpack.c.l.b16 %v1094
    %v1127 = vunpack.c.l.b16 %v1095
    %v1128 = vunpack.c.l.b16 %v1096
    %v1129 = vunpack.c.l.b16 %v1097
    %v1130 = vunpack.c.l.b16 %v1098
    %v1131 = vunpack.c.l.b16 %v1099
    %v1132 = vunpack.c.l.b16 %v1100
    %v1133 = vunpack.c.l.b16 %v1101
    %v1134 = vunpack.c.l.b16 %v1102
    %v1135 = vunpack.c.l.b16 %v1103
    %v1136 = vpack.c.b16 %v1121, %v1120
    %v1137 = vpack.c.b16 %v1123, %v1122
    %v1138 = vpack.c.b16 %v1125, %v1124
    %v1139 = vpack.c.b16 %v1127, %v1126
    %v1140 = vpack.c.b16 %v1129, %v1128
    %v1141 = vpack.c.b16 %v1131, %v1130
    %v1142 = vpack.c.b16 %v1133, %v1132
    %v1143 = vpack.c.b16 %v1135, %v1134
    %1152 = vmatpush.bf16.msra.mxu0 %v1143
    %1153 = vmatpush.bf16.msra.mxu0 %v1142
    %1154 = vmatpush.bf16.msra.mxu0 %v1141
    %1155 = vmatpush.bf16.msra.mxu0 %v1140
    %1156 = vmatpush.bf16.msra.mxu0 %v1139
    %1157 = vmatpush.bf16.msra.mxu0 %v1138
    %1158 = vmatpush.bf16.msra.mxu0 %v1137
    %1159 = vmatpush.bf16.msra.mxu0 %v1136
    %1160 = vmatmul.bf16.gmra.mxu0 %v1084
    %v1161 = vpop.f32.mrf.mxu0
    %v1162 = vadd.f32 0.0, %v1161
    %v1163 = vpop.f32.mrf.mxu0
    %v1164 = vadd.f32 0.0, %v1163
    %1165 = vmatmul.bf16.gmra.mxu0 %v1085
    %v1166 = vpop.f32.mrf.mxu0
    %v1167 = vadd.f32 0.0, %v1166
    %v1168 = vpop.f32.mrf.mxu0
    %v1169 = vadd.f32 0.0, %v1168
    %1170 = vmatmul.bf16.gmra.mxu0 %v1086
    %v1171 = vpop.f32.mrf.mxu0
    %v1172 = vadd.f32 0.0, %v1171
    %v1173 = vpop.f32.mrf.mxu0
    %v1174 = vadd.f32 0.0, %v1173
    %1175 = vmatmul.bf16.gmra.mxu0 %v1087
    %v1176 = vpop.f32.mrf.mxu0
    %v1177 = vadd.f32 0.0, %v1176
    %v1178 = vpop.f32.mrf.mxu0
    %v1179 = vadd.f32 0.0, %v1178
    %1180 = vdwg.mxu0
    %1181 = vst [vmem:[#allocation10] sm:$0xff] %v1162
    %1182 = vst [vmem:[#allocation10 + $0x8] sm:$0xff] %v1164
    %1183 = vst [vmem:[#allocation10 + $0x10] sm:$0xff] %v1167
    %1184 = vst [vmem:[#allocation10 + $0x18] sm:$0xff] %v1169
    %1185 = vst [vmem:[#allocation10 + $0x20] sm:$0xff] %v1172
    %1186 = vst [vmem:[#allocation10 + $0x28] sm:$0xff] %v1174
    %1187 = vst [vmem:[#allocation10 + $0x30] sm:$0xff] %v1177
    %1188 = vst [vmem:[#allocation10 + $0x38] sm:$0xff] %v1179
    // Predicated region
    $region34: #{tpu_custom_call.1} parent=1 // pred_check
      _
    $region35: #{tpu_custom_call.1} parent=1 // pred_check_branch
      %1190 = sbr.rel (0) target = $region37
    $region36: #{tpu_custom_call.1} parent=1 // pred_region
      %1192 = vsyncadd [#allocation4], 0
      %s1193 = sshll.u32 [#allocation10], 4
      %s1194 = int_to_ptr.vmem [resolvable:$true] %s1193
      %s1195 = sshll.u32 %s4, 4
      %s1196 = int_to_ptr.hbm [resolvable:$true] %s1195
      %1201 = dma.vmem_to_hbm [thread:$0]  %s1194, 1024, %s1196, [#allocation4], 128, 128, 8
    $region37: #{tpu_custom_call.1} parent=1 // pred_fallthru
      _
    // Predicated region
    $region38: #{tpu_custom_call.1} parent=1 // pred_check
      _
    $region39: #{tpu_custom_call.1} parent=1 // pred_check_branch
      %1203 = sbr.rel (0) target = $region41
    $region40: #{tpu_custom_call.1} parent=1 // pred_region
      %1205 = dma.done [#allocation4], 1024
    $region41: #{tpu_custom_call.1} parent=1 // pred_fallthru
      _
    %1206 = vsyncpa [#allocation3], 1
    %1207 = vsyncpa [#allocation6], 1
    %1208 = vsyncpa [#allocation9], 1
    %1209 = vsyncpa [#allocation4], 1

</llo_original>
